<compile_context>
chip_gen: v6e
topology: v6e:2x2x1
jax: 0.10.0
libtpu: 0.0.40
codegen_flags: <defaults>
</compile_context>

<pallas_src>
import jax
import jax.numpy as jnp
from jax import lax
from jax.experimental import pallas as pl
from jax.experimental.pallas import tpu as pltpu

_MIB = 1024 * 1024


# ----------------------------- kernels ---------------------------------------


def _maxpool_lengths_kernel(lens_ref, x_ref, o_ref):
    """lens_ref: (tb, 1) int32 valid lengths
       x_ref:    (tb, ts, th) native dtype
       o_ref:    (tb, th) running-max accumulator, resident across the seq grid axis."""
    s = pl.program_id(2)
    x = x_ref[...]
    tb, ts, _ = x.shape
    # In-kernel mask: position >= length. Sublane iota over (tb, ts, 1); the hidden
    # broadcast inside jnp.where is a cheap lane broadcast.
    pos = lax.broadcasted_iota(jnp.int32, (tb, ts, 1), 1) + s * ts
    keep = pos < lens_ref[...][:, :, None]                       # (tb, ts, 1) bool
    neg_inf = jnp.array(-jnp.inf, dtype=x.dtype)
    tile_max = jnp.max(jnp.where(keep, x, neg_inf), axis=1)      # (tb, th)

    @pl.when(s == 0)
    def _init():
        o_ref[...] = tile_max

    @pl.when(s != 0)
    def _accum():
        o_ref[...] = jnp.maximum(o_ref[...], tile_max)


def _maxpool_bias_kernel(bias_ref, x_ref, o_ref):
    """bias_ref: (tb, ts, 1) x-dtype {+inf keep, -inf masked}
       x_ref:    (tb, ts, th); o_ref: (tb, th) running-max accumulator."""
    s = pl.program_id(2)
    tile_max = jnp.max(jnp.minimum(x_ref[...], bias_ref[...]), axis=1)

    @pl.when(s == 0)
    def _init():
        o_ref[...] = tile_max

    @pl.when(s != 0)
    def _accum():
        o_ref[...] = jnp.maximum(o_ref[...], tile_max)


# --------------------------- tiling heuristics --------------------------------


def _vmem_limit_bytes():
    """Explicit scoped-VMEM limit derived from the chip's physical VMEM."""
    try:
        cap = int(pltpu.get_tpu_info().vmem_capacity_bytes)
    except Exception:
        cap = 64 * _MIB  # conservative default: v7x per-TensorCore VMEM
    return max(min(cap - 16 * _MIB, 100 * _MIB), 32 * _MIB)


def _pick_block(dim, align, cap):
    """Biggest legal block for `dim`: the full dim if it fits `cap` (always legal),
    else the largest multiple of `align` that divides `dim` and is <= cap (or None)."""
    cap = max(int(cap), 0)
    if dim <= cap:
        return dim
    best = None
    t = align
    while t <= cap:
        if dim % t == 0:
            best = t
        t += align
    return best


def _plan(bs, sl, h, itemsize, budget):
    """Pick (tb, ts, th) so the x block fits `budget` and every tile divides its
    (possibly padded) dim exactly. Returns (tb, ts, th, bs_p, sl_p, h_p)."""
    sub = {4: 8, 2: 16, 1: 32}.get(itemsize, 8)   # sublane alignment for the seq axis

    # Hidden tile: prefer full hidden (contiguous DMA rows, no hidden grid axis).
    h_p = h
    min_rows = min(sl, sub)
    if h * itemsize * min_rows <= budget:
        th = h
    else:
        if h % 128 != 0:
            h_p = ((h + 127) // 128) * 128         # padded tail is sliced off
        th = _pick_block(h_p, 128, budget // max(itemsize * min_rows, 1))
        if th is None:
            h_p = ((h + 127) // 128) * 128
            th = 128

    # Sequence tile (reduction axis).
    sl_p = sl
    ts = _pick_block(sl_p, sub, budget // max(itemsize * th, 1))
    if ts is None:
        sl_p = ((sl + sub - 1) // sub) * sub       # padded rows are masked in-kernel
        ts = _pick_block(sl_p, sub, budget // max(itemsize * th, 1)) or sub

    # Batch tile: second-to-last dim of the output block => multiple of 8 or full bs.
    bs_p = bs
    cap_tb = max(budget // max(itemsize * th * ts, 1), 1)
    if bs <= cap_tb:
        tb = bs
    else:
        tb = _pick_block(bs, 8, cap_tb)
        if tb is None:
            bs_p = ((bs + 7) // 8) * 8
            tb = _pick_block(bs_p, 8, cap_tb) or 8

    return tb, ts, th, bs_p, sl_p, h_p


def _maybe_split_for_cores(bs_p, h_p, tb, ts, th, itemsize):
    """Expose >= 2 (batch x hidden) parallel blocks so v7x's two TensorCores both
    get work; only split when the block stays comfortably sized."""
    if (bs_p // tb) * (h_p // th) >= 2:
        return tb, th
    if tb * ts * th * itemsize < 2 * _MIB:
        return tb, th
    if th % 256 == 0:                 # th/2 stays a 128-multiple divisor of h_p
        return tb, th // 2
    if tb % 16 == 0:                  # tb/2 stays a multiple of 8 dividing bs_p
        return tb // 2, th
    return tb, th


# ------------------------------- wrapper --------------------------------------


def max_pool_layer(inputs, mask_or_lengths=None, *, _block_budget_bytes=None):
    """Pallas implementation of MaxPoolLayer.forward.

    inputs: (bs, sl, hidden) float array (streamed in its native dtype)
    mask_or_lengths: None, (bs,) int lengths, or (bs, sl) boolean/int mask
    returns: (bs, hidden) in the input dtype
    """
    inputs = jnp.asarray(inputs)
    assert inputs.ndim == 3, "inputs must be (bs, sl, hidden)"
    assert jnp.issubdtype(inputs.dtype, jnp.floating), \
        "MaxPoolLayer expects a floating dtype (masked_fill(-inf) semantics)"
    bs, sl, h = inputs.shape
    dtype = inputs.dtype
    itemsize = jnp.dtype(dtype).itemsize

    vmem_limit = _vmem_limit_bytes()
    # ~2 x-block buffers + out accumulator + tiny lens/bias stream + slack.
    budget = int(_block_budget_bytes) if _block_budget_bytes else int(vmem_limit * 0.40)

    tb, ts, th, bs_p, sl_p, h_p = _plan(bs, sl, h, itemsize, budget)
    tb, th = _maybe_split_for_cores(bs_p, h_p, tb, ts, th, itemsize)

    # Mask representation: lengths (or None) -> in-kernel iota mask, no mask DMA;
    # explicit 2-D mask -> x-dtype {+inf keep, -inf masked} bias + jnp.minimum.
    use_lengths = True
    if mask_or_lengths is None:
        lengths = jnp.full((bs,), sl, dtype=jnp.int32)
    else:
        mol = jnp.asarray(mask_or_lengths)
        if mol.ndim == 1:
            lengths = mol.astype(jnp.int32)
        else:
            use_lengths = False
            bias = jnp.where(mol.astype(bool), -jnp.inf, jnp.inf).astype(dtype)  # (bs, sl)

    # Pad only when a partial tile cannot legally cover the dim; tiles then divide
    # their dims exactly so no garbage enters the max reduction.
    x = inputs
    if (bs_p, sl_p, h_p) != (bs, sl, h):
        x = jnp.pad(x, ((0, bs_p - bs), (0, sl_p - sl), (0, h_p - h)))
    if use_lengths:
        lens2 = lengths[:, None]                           # (bs, 1) int32
        if bs_p != bs:
            lens2 = jnp.pad(lens2, ((0, bs_p - bs), (0, 0)))
        # padded seq rows have position >= sl >= length -> masked automatically
    else:
        bias3 = bias[:, :, None]                           # (bs, sl, 1) x-dtype
        if (bs_p, sl_p) != (bs, sl):
            bias3 = jnp.pad(bias3, ((0, bs_p - bs), (0, sl_p - sl), (0, 0)),
                            constant_values=-jnp.inf)

    grid = (bs_p // tb, h_p // th, sl_p // ts)              # seq (reduction) axis last

    x_spec = pl.BlockSpec((tb, ts, th), lambda ib, ih, isq: (ib, isq, ih))
    # Same (ib, ih) block across the seq axis -> VMEM-resident running-max accumulator.
    out_spec = pl.BlockSpec((tb, th), lambda ib, ih, isq: (ib, ih))
    cparams = pltpu.CompilerParams(
        dimension_semantics=("parallel", "parallel", "arbitrary"),
        vmem_limit_bytes=int(vmem_limit),
    )
    # Note: for heavily ragged batches one could additionally skip fully-masked seq
    # tiles via PrefetchScalarGridSpec; not needed for correctness.

    if use_lengths:
        out = pl.pallas_call(
            _maxpool_lengths_kernel,
            out_shape=jax.ShapeDtypeStruct((bs_p, h_p), dtype),
            grid=grid,
            in_specs=[
                pl.BlockSpec((tb, 1), lambda ib, ih, isq: (ib, 0)),
                x_spec,
            ],
            out_specs=out_spec,
            compiler_params=cparams,
        )(lens2, x)
    else:
        out = pl.pallas_call(
            _maxpool_bias_kernel,
            out_shape=jax.ShapeDtypeStruct((bs_p, h_p), dtype),
            grid=grid,
            in_specs=[
                pl.BlockSpec((tb, ts, 1), lambda ib, ih, isq: (ib, isq, 0)),
                x_spec,
            ],
            out_specs=out_spec,
            compiler_params=cparams,
        )(bias3, x)

    if (bs_p, h_p) != (bs, h):
        out = out[:bs, :h]
    return out


# ------------------------------- self-test -------------------------------------

if __name__ == "__main__":
    key = jax.random.PRNGKey(0)
    kx, k2 = jax.random.split(key)

    # Small canonical shape from the module: (bs, sl, hidden) = (2, 8, 32).
    bs, sl, h = 2, 8, 32
    x = jax.random.normal(kx, (bs, sl, h), dtype=jnp.float32)
    lengths = jnp.array([5, 8], dtype=jnp.int32)
    ref_mask = jnp.arange(sl)[None, :] >= lengths[:, None]
    ref = jnp.max(jnp.where(ref_mask[:, :, None], -jnp.inf, x), axis=1)

    out = jax.block_until_ready(max_pool_layer(x, lengths))
    assert out.shape == (bs, h) and out.dtype == x.dtype
    assert jnp.allclose(out, ref, atol=1e-6), "mismatch (lengths)"

    out_none = jax.block_until_ready(max_pool_layer(x, None))
    assert jnp.allclose(out_none, jnp.max(x, axis=1), atol=1e-6), "mismatch (mask=None)"

    out_m2d = jax.block_until_ready(max_pool_layer(x, ref_mask))
    assert jnp.allclose(out_m2d, ref, atol=1e-6), "mismatch (2-D mask)"

    # Native bf16 path (no wrapper upcast; select/max exact in bf16).
    xb = x.astype(jnp.bfloat16)
    out_bf = jax.block_until_ready(max_pool_layer(xb, lengths))
    ref_bf = jnp.max(jnp.where(ref_mask[:, :, None],
                               jnp.array(-jnp.inf, jnp.bfloat16), xb), axis=1)
    assert out_bf.dtype == jnp.bfloat16 and jnp.array_equal(out_bf, ref_bf), "mismatch (bf16)"

    # Force a multi-step seq reduction (tiny block budget) to exercise the
    # running-max accumulator on both kernel variants.
    bs2, sl2, h2 = 8, 64, 256
    x2 = jax.random.normal(k2, (bs2, sl2, h2), dtype=jnp.float32)
    lengths2 = jnp.arange(1, bs2 + 1, dtype=jnp.int32) * 8
    m2 = jnp.arange(sl2)[None, :] >= lengths2[:, None]
    ref2 = jnp.max(jnp.where(m2[:, :, None], -jnp.inf, x2), axis=1)

    out2 = jax.block_until_ready(max_pool_layer(x2, lengths2, _block_budget_bytes=16384))
    assert jnp.allclose(out2, ref2, atol=1e-6), "mismatch (tiled lengths)"
    out2m = jax.block_until_ready(max_pool_layer(x2, m2, _block_budget_bytes=16384))
    assert jnp.allclose(out2m, ref2, atol=1e-6), "mismatch (tiled 2-D mask)"

    print("KERNEL_OK")
</pallas_src>

<mosaic_0001>
module attributes {stable_mosaic.version = 11 : i64} {
  func.func @_maxpool_lengths_kernel(%arg0: i32, %arg1: i32, %arg2: i32, %arg3: memref<2x1xi32, #tpu.memory_space<vmem>>, %arg4: memref<2x8x32xf32, #tpu.memory_space<vmem>>, %arg5: memref<2x32xf32, #tpu.memory_space<vmem>>) attributes {dimension_semantics = [#tpu.dimension_semantics<parallel>, #tpu.dimension_semantics<parallel>, #tpu.dimension_semantics<arbitrary>], iteration_bounds = array<i64: 1, 1, 1>, scalar_prefetch = 0 : i64, scratch_operands = 0 : i64, tpu.core_type = #tpu.core_type<tc>, window_params = [{transform_indices = @transform_0, window_bounds = array<i64: 2, 1>}, {transform_indices = @transform_1, window_bounds = array<i64: 2, 8, 32>}, {transform_indices = @transform_2, window_bounds = array<i64: 2, 32>}]} {
    %c0 = arith.constant 0 : index
    %c0_0 = arith.constant 0 : index
    %c0_1 = arith.constant 0 : index
    %0 = vector.load %arg4[%c0, %c0_0, %c0_1] : memref<2x8x32xf32, #tpu.memory_space<vmem>>, vector<2x8x32xf32>
    %1 = tpu.iota {dimensions = array<i32: 1>} : vector<2x8x1xi32>
    %c8_i32 = arith.constant 8 : i32
    %2 = arith.muli %arg2, %c8_i32 : i32
    %3 = vector.broadcast %2 : i32 to vector<2x8x1xi32>
    %4 = arith.addi %1, %3 : vector<2x8x1xi32>
    %c0_2 = arith.constant 0 : index
    %c0_3 = arith.constant 0 : index
    %5 = vector.load %arg3[%c0_2, %c0_3] : memref<2x1xi32, #tpu.memory_space<vmem>>, vector<2x1xi32>
    %6 = vector.shape_cast %5 : vector<2x1xi32> to vector<2x1x1xi32>
    %7 = vector.broadcast %6 : vector<2x1x1xi32> to vector<2x8x1xi32>
    %8 = arith.cmpi slt, %4, %7 : vector<2x8x1xi32>
    %cst = arith.constant 0xFF800000 : f32
    %9 = vector.shape_cast %8 : vector<2x8x1xi1> to vector<2x8x1xi1>
    %10 = vector.broadcast %9 : vector<2x8x1xi1> to vector<2x8x32xi1>
    %11 = vector.broadcast %cst : f32 to vector<2x8x32xf32>
    %12 = arith.select %10, %0, %11 : vector<2x8x32xi1>, vector<2x8x32xf32>
    %cst_4 = arith.constant dense<0xFF800000> : vector<2x32xf32>
    %13 = vector.multi_reduction <maximumf>, %12, %cst_4 [1] : vector<2x8x32xf32> to vector<2x32xf32>
    %c0_i32 = arith.constant 0 : i32
    %14 = arith.cmpi eq, %arg2, %c0_i32 : i32
    %15 = arith.extui %14 : i1 to i32
    %c0_i32_5 = arith.constant 0 : i32
    %16 = arith.cmpi ne, %15, %c0_i32_5 : i32
    scf.if %16 {
      %c0_8 = arith.constant 0 : index
      %c0_9 = arith.constant 0 : index
      %20 = vector.load %arg5[%c0_8, %c0_9] : memref<2x32xf32, #tpu.memory_space<vmem>>, vector<2x32xf32>
      tpu.vector_store %arg5[%c0_8, %c0_9], %13 {strides = array<i32>} : memref<2x32xf32, #tpu.memory_space<vmem>>, vector<2x32xf32>,
    } else {
    }
    %c0_i32_6 = arith.constant 0 : i32
    %17 = arith.cmpi ne, %arg2, %c0_i32_6 : i32
    %18 = arith.extui %17 : i1 to i32
    %c0_i32_7 = arith.constant 0 : i32
    %19 = arith.cmpi ne, %18, %c0_i32_7 : i32
    scf.if %19 {
      %c0_8 = arith.constant 0 : index
      %c0_9 = arith.constant 0 : index
      %20 = vector.load %arg5[%c0_8, %c0_9] : memref<2x32xf32, #tpu.memory_space<vmem>>, vector<2x32xf32>
      %21 = arith.maximumf %20, %13 : vector<2x32xf32>
      %c0_10 = arith.constant 0 : index
      %c0_11 = arith.constant 0 : index
      %22 = vector.load %arg5[%c0_10, %c0_11] : memref<2x32xf32, #tpu.memory_space<vmem>>, vector<2x32xf32>
      tpu.vector_store %arg5[%c0_10, %c0_11], %21 {strides = array<i32>} : memref<2x32xf32, #tpu.memory_space<vmem>>, vector<2x32xf32>,
    } else {
    }
    return
  }
  func.func @transform_0(%arg0: i32, %arg1: i32, %arg2: i32) -> (i32, i32) {
    %c0_i32 = arith.constant 0 : i32
    %c0_i32_0 = arith.constant 0 : i32
    return %arg0, %c0_i32 : i32, i32
  }
  func.func @transform_1(%arg0: i32, %arg1: i32, %arg2: i32) -> (i32, i32, i32) {
    %c0_i32 = arith.constant 0 : i32
    return %arg0, %arg2, %arg1 : i32, i32, i32
  }
  func.func @transform_2(%arg0: i32, %arg1: i32, %arg2: i32) -> (i32, i32) {
    %c0_i32 = arith.constant 0 : i32
    return %arg0, %arg1 : i32, i32
  }
}

</mosaic_0001>

<llo_original>
// kernel: tpu_custom_call.1
$region0: #{tpu_custom_call.1}
  #allocation0 [shape = 'u32[]', space=smem, size = 0x4, offset = 0x4, fixed_abs, tag = 'smem constant byte address 0x4 - core index']
  #allocation1 [shape = 'u32[144,128]{1,0:T(1,128)}', space=vmem, size = 0x12000, scoped, tag = 'internal scratch']
  %s0 = inlined_call_operand.vmem [shape: s32[2,1], index: 0, kind: input, shape index: {}]
  %s1 = inlined_call_operand.hbm [shape: f32[2,8,32], index: 1, kind: input, shape index: {}]
  %s2 = inlined_call_operand.hbm [shape: f32[2,32], index: 2, kind: output, shape index: {}]
  %s3 = sld [smem:[#allocation0]]
  $region30: #{tpu_custom_call.1} parent=0
    _
  %s5 = ssub.s32 1, %s3
  %s6 = scalar_select 0, %s5, %s3
  $region1: #{tpu_custom_call.1} parent=0
    #allocation2 [shape = 'u8[8192]{0}', space=vmem, size = 0x2000, scoped, tag = 'input window, operand 1, single buffered']
    #allocation3 [shape = 's32[1]{0}', space=sflag, size = 0x4, scoped, tag = 'scoped memory for tpu_custom_call.1']
    #allocation4 [shape = 's32[1]{0}', space=sflag, size = 0x4, scoped, tag = 'scoped memory for tpu_custom_call.1']
    #allocation5 [shape = 'u8[1024]{0}', space=vmem, size = 0x400, scoped, tag = 'output window, operand 0, single buffered']
    %7 = vsyncpa [#allocation3], 0
    %8 = vsyncpa [#allocation4], 0
    // Predicated region
    $region2: #{tpu_custom_call.1} parent=1 // pred_check
      _
    $region3: #{tpu_custom_call.1} parent=1 // pred_check_branch
      %10 = sbr.rel (0) target = $region5
    $region4: #{tpu_custom_call.1} parent=1 // pred_region
      _
    $region5: #{tpu_custom_call.1} parent=1 // pred_fallthru
      _
    // Predicated region
    $region6: #{tpu_custom_call.1} parent=1 // pred_check
      _
    $region7: #{tpu_custom_call.1} parent=1 // pred_check_branch
      %12 = sbr.rel (0) target = $region9
    $region8: #{tpu_custom_call.1} parent=1 // pred_region
      %s14 = ssub.s32 256, 256
      %15 = vsyncadd [#allocation3], %s14
      %s16 = sshll.u32 [#allocation2], 4
      %s17 = int_to_ptr.vmem [resolvable:$true] %s16
      %22 = dma.hbm_to_vmem [thread:$0]  %s1, 256, %s17, [#allocation3], 128, 128, 8
    $region9: #{tpu_custom_call.1} parent=1 // pred_fallthru
      _
    // Predicated region
    $region10: #{tpu_custom_call.1} parent=1 // pred_check
      _
    $region11: #{tpu_custom_call.1} parent=1 // pred_check_branch
      %24 = sbr.rel (0) target = $region13
    $region12: #{tpu_custom_call.1} parent=1 // pred_region
      %25 = dma.done [#allocation3], 256
    $region13: #{tpu_custom_call.1} parent=1 // pred_fallthru
      _
    %v26 = vld [vmem:[#allocation2] sm:$0xff]
    %v27 = vld [vmem:[#allocation2 + $0x8] sm:$0xff]
    %v28 = vlaneseq
    %v29 = vshrl.u32 %v28, 7
    %s30 = smul.u32 0, 8
    %v31 = vstv %s30
    %v32 = vadd.s32 %v29, %v31
    %v33 = vld [vmem:[%s0] sm:$0x3]
    %v35 = vunpack.c.l.s4 1966171168
    %v36 = vunpack.c.0.s8 %v35
    %v37 = vlaneseq
    %v38 = vshrl.u32 %v37, 7
    %v39 = vsub.s32 %v36, %v38
    %v40 = vrot.slane %v33, %v39
    %v41 = vcombine.high %v40, %v40
    %v43 = vunpack.c.l.s4 1966171168
    %v44 = vunpack.c.0.s8 %v43
    %v45 = vlaneseq
    %v46 = vshrl.u32 %v45, 7
    %v47 = vsub.s32 %v44, %v46
    %v48 = vrot.slane %v40, %v47
    %v50 = vunpack.c.l.s4 1966171168
    %v51 = vunpack.c.0.s8 %v50
    %v52 = vlaneseq
    %v53 = vshrl.u32 %v52, 7
    %v54 = vsub.s32 %v51, %v53
    %v55 = vrot.slane %v41, %v54
    %v56 = vlaneseq
    %v57 = vshrl.u32 %v56, 7
    %v58 = vsub.s32 0, %v57
    %v59 = vrot.slane %v48, %v58
    %v60 = vlaneseq
    %v61 = vshrl.u32 %v60, 7
    %v62 = vsub.s32 0, %v61
    %v63 = vrot.slane %v55, %v62
    %vm64 = vcmp.lt.s32.totalorder %v32, %v59
    %vm65 = vcmp.lt.s32.totalorder %v32, %v63
    %v66 = vsel %vm64, 1, 0
    %v67 = vsel %vm65, 1, 0
    %68 = vset.pattern.permute.xlu0 0
    %69 = vperm.xlu0 %68, %v66
    %v70 = vpop.permute.xlu0 %69
    %71 = vset.pattern.permute.xlu0 0
    %72 = vperm.xlu0 %71, %v67
    %v73 = vpop.permute.xlu0 %72
    %vm74 = vcmp.eq.s32.totalorder %v70, 1
    %vm75 = vcmp.eq.s32.totalorder %v73, 1
    %v76 = vsel %vm74, %v26, -inf
    %v77 = vsel %vm75, %v27, -inf
    %vm78 = vcmask 261120
    %v79 = vsel %vm78, %v76, -inf
    %v80 = vrot.slane %v79, 4
    %v81 = vmax.f32 %v79, %v80
    %v82 = vrot.slane %v81, 2
    %v83 = vmax.f32 %v81, %v82
    %v84 = vrot.slane %v83, 1
    %v85 = vmax.f32 %v83, %v84
    %v86 = vsel %vm78, %v77, -inf
    %v87 = vrot.slane %v86, 4
    %v88 = vmax.f32 %v86, %v87
    %v89 = vrot.slane %v88, 2
    %v90 = vmax.f32 %v88, %v89
    %v91 = vrot.slane %v90, 1
    %v92 = vmax.f32 %v90, %v91
    %p93 = scmp.eq.s32.totalorder 0, 0
    // Predicated region
    $region14: #{tpu_custom_call.1} parent=1 // pred_check
      %p94 = pneg %p93
    $region15: #{tpu_custom_call.1} parent=1 // pred_check_branch
      %96 = sbr.rel (%p94) target = $region17
    $region16: #{tpu_custom_call.1} parent=1 // pred_region
      %vm99 = vcmask 1041409
      %v100 = vsel %vm99, %v92, %v85
      %vm102 = vcmask 254976
      %103 = vst.msk [vmem:[#allocation5] sm:$0x3] %vm102, %v100
    $region17: #{tpu_custom_call.1} parent=1 // pred_fallthru
      _
    %p104 = scmp.ne.s32.totalorder 0, 0
    // Predicated region
    $region18: #{tpu_custom_call.1} parent=1 // pred_check
      %p105 = pneg %p104
    $region19: #{tpu_custom_call.1} parent=1 // pred_check_branch
      %107 = sbr.rel (%p105) target = $region21
    $region20: #{tpu_custom_call.1} parent=1 // pred_region
      %v108 = vld [vmem:[#allocation5] sm:$0x3]
      %vm111 = vcmask 1041409
      %v112 = vsel %vm111, %v92, %v85
      %v114 = vmax.f32 %v108, %v112
      %vm115 = vcmask 254976
      %116 = vst.msk [vmem:[#allocation5] sm:$0x3] %vm115, %v114
    $region21: #{tpu_custom_call.1} parent=1 // pred_fallthru
      _
    // Predicated region
    $region22: #{tpu_custom_call.1} parent=1 // pred_check
      _
    $region23: #{tpu_custom_call.1} parent=1 // pred_check_branch
      %118 = sbr.rel (0) target = $region25
    $region24: #{tpu_custom_call.1} parent=1 // pred_region
      %s120 = ssub.s32 32, 32
      %121 = vsyncadd [#allocation4], %s120
      %s123 = sshll.u32 [#allocation5], 4
      %s124 = int_to_ptr.vmem [resolvable:$true] %s123
      %126 = dma.vmem_to_hbm [thread:$0]  %s124, 32, %s2, [#allocation4]
    $region25: #{tpu_custom_call.1} parent=1 // pred_fallthru
      _
    // Predicated region
    $region26: #{tpu_custom_call.1} parent=1 // pred_check
      _
    $region27: #{tpu_custom_call.1} parent=1 // pred_check_branch
      %128 = sbr.rel (0) target = $region29
    $region28: #{tpu_custom_call.1} parent=1 // pred_region
      %129 = dma.done [#allocation4], 32
    $region29: #{tpu_custom_call.1} parent=1 // pred_fallthru
      _
    %130 = vsyncpa [#allocation3], 1
    %131 = vsyncpa [#allocation4], 1

</llo_original>
